<compile_context>
chip_gen: v6e
topology: v6e:2x2x1
jax: 0.10.0
libtpu: 0.0.40
codegen_flags: <defaults>
</compile_context>

<pallas_src>
import functools

import jax
import jax.numpy as jnp
from jax.experimental import pallas as pl
from jax.experimental.pallas import tpu as pltpu


_MAX_TILE_K = 2048   # max layer-1 contraction chunk kept in VMEM at once
_MAX_TILE_B = 2048   # max batch rows per grid step


def _round_up(n: int, m: int) -> int:
    return ((n + m - 1) // m) * m


def _k_layout(d_in: int, max_tile_k: int = _MAX_TILE_K):
    """Padded D_in, layer-1 K-chunk size, and number of K chunks."""
    d_in_p = _round_up(max(d_in, 1), 128)
    if d_in_p <= max_tile_k:
        return d_in_p, d_in_p, 1
    d_in_p = _round_up(d_in_p, max_tile_k)
    return d_in_p, max_tile_k, d_in_p // max_tile_k


def _vmem_limit_bytes() -> int:
    """Scoped VMEM limit derived from the chip's physical VMEM."""
    phys = 64 * 1024 * 1024
    try:
        info = pltpu.get_tpu_info()
        cap = getattr(info, "vmem_capacity_bytes", None)
        if cap:
            phys = int(cap)
    except Exception:
        pass
    # ~96 MiB on v5e/v6e (128 MiB physical), ~48 MiB on v7x (64 MiB physical).
    return min(phys * 3 // 4, 96 * 1024 * 1024)


def _choose_batch_tiling(B, tile_k, n_k, h1, h2, d_out, vmem_limit):
    """Pick (tile_b, n_tiles, b_pad) so the working set fits the VMEM budget."""
    w1_bufs = 1 if n_k == 1 else 2
    weight_bytes = ((tile_k * h1 * w1_bufs + h1 * h2 + h2 * d_out) * 2
                    + (h1 + h2 + d_out) * 4)
    # per batch row: f32 x stream (double-buffered) + f32 out (double-buffered)
    # + f32 activations / accumulator headroom.
    per_row = tile_k * 4 * 2 + d_out * 4 * 2 + (2 * h1 + h2) * 4
    avail = int(vmem_limit * 0.75) - weight_bytes
    cap = (avail // per_row) // 16 * 16
    cap = max(16, min(_MAX_TILE_B, cap))

    b16 = _round_up(max(B, 1), 16)            # multiple of 16 (bf16-friendly)
    min_tiles = 2 if B > 16 else 1            # >=2 tiles => megacore on v7x
    n_tiles = max(pl.cdiv(b16, cap), min_tiles)
    tile_b = min(cap, _round_up(pl.cdiv(b16, n_tiles), 16))
    n_tiles = pl.cdiv(b16, tile_b)
    return tile_b, n_tiles, tile_b * n_tiles


# --------------------------- kernel bodies ----------------------------------

def _tail(h, w2_ref, b2_ref, w3_ref, b3_ref, o_ref, use_softmax):
    """Layers 2 and 3 (+ optional softmax) given the post-layer-1 activation."""
    h = jnp.dot(h.astype(jnp.bfloat16), w2_ref[...],
                preferred_element_type=jnp.float32)
    h = jnp.maximum(h + b2_ref[...], 0.0)
    y = jnp.dot(h.astype(jnp.bfloat16), w3_ref[...],
                preferred_element_type=jnp.float32)
    y = y + b3_ref[...]
    if use_softmax:
        m = jnp.max(y, axis=-1, keepdims=True)
        e = jnp.exp(y - m)
        y = e / jnp.sum(e, axis=-1, keepdims=True)   # exact normalization
    o_ref[...] = y.astype(o_ref.dtype)


def _mlp_kernel(x_ref, w1_ref, b1_ref, w2_ref, b2_ref, w3_ref, b3_ref, o_ref,
                *, use_softmax: bool):
    # Whole contraction in one shot (D_in fits in VMEM).  x arrives as f32;
    # the bf16 cast is a VPU op hidden under the MXU / DMA.
    x = x_ref[...].astype(jnp.bfloat16)
    h = jnp.dot(x, w1_ref[...], preferred_element_type=jnp.float32)
    h = jnp.maximum(h + b1_ref[...], 0.0)
    _tail(h, w2_ref, b2_ref, w3_ref, b3_ref, o_ref, use_softmax)


def _mlp_kernel_ktiled(x_ref, w1_ref, b1_ref, w2_ref, b2_ref, w3_ref, b3_ref,
                       o_ref, acc_ref, *, use_softmax: bool):
    # Layer-1 contraction tiled over K (grid axis 1, "arbitrary"):
    # accumulate into f32 VMEM scratch, finalize on the last K step.
    k = pl.program_id(1)

    @pl.when(k == 0)
    def _init():
        acc_ref[...] = jnp.zeros_like(acc_ref)

    x = x_ref[...].astype(jnp.bfloat16)
    acc_ref[...] += jnp.dot(x, w1_ref[...], preferred_element_type=jnp.float32)

    @pl.when(k == pl.num_programs(1) - 1)
    def _finalize():
        h = jnp.maximum(acc_ref[...] + b1_ref[...], 0.0)
        _tail(h, w2_ref, b2_ref, w3_ref, b3_ref, o_ref, use_softmax)


# --------------------------- host-side wrapper -------------------------------

def prepare_params(params, *, max_tile_k: int = _MAX_TILE_K):
    """One-time pad / cast of the weights (hoisted out of the per-call path)."""
    w1, b1 = params["w1"], params["b1"]
    w2, b2 = params["w2"], params["b2"]
    w3, b3 = params["w3"], params["b3"]
    d_in = int(w1.shape[0])
    d_in_p, _, _ = _k_layout(d_in, max_tile_k)
    w1p = jnp.pad(w1, ((0, d_in_p - d_in), (0, 0))) if d_in_p != d_in else w1
    return {
        "_prepared": True,
        "d_in": d_in,
        "max_tile_k": int(max_tile_k),
        "w1": jnp.asarray(w1p, jnp.bfloat16),
        "b1": jnp.asarray(b1, jnp.float32).reshape(1, -1),
        "w2": jnp.asarray(w2, jnp.bfloat16),
        "b2": jnp.asarray(b2, jnp.float32).reshape(1, -1),
        "w3": jnp.asarray(w3, jnp.bfloat16),   # unpadded N = D_out
        "b3": jnp.asarray(b3, jnp.float32).reshape(1, -1),
    }


def mlp_forward(x, params, final_activation=None, *, max_tile_k: int = _MAX_TILE_K):
    """Fused MLP forward.  `params` may be raw or the output of prepare_params."""
    if not params.get("_prepared", False):
        params = prepare_params(params, max_tile_k=max_tile_k)
    max_tile_k = params["max_tile_k"]
    d_in = params["d_in"]

    B = x.shape[0]
    x2d = x.reshape(B, -1).astype(jnp.float32)           # torch.flatten(x, 1)
    assert x2d.shape[1] == d_in, "input feature count does not match params"

    w1, b1 = params["w1"], params["b1"]
    w2, b2 = params["w2"], params["b2"]
    w3, b3 = params["w3"], params["b3"]
    h1, h2, d_out = w1.shape[1], w2.shape[1], w3.shape[1]

    d_in_p, tile_k, n_k = _k_layout(d_in, max_tile_k)
    vmem_limit = _vmem_limit_bytes()
    tile_b, n_tiles, b_pad = _choose_batch_tiling(
        B, tile_k, n_k, h1, h2, d_out, vmem_limit)

    pad_b, pad_k = b_pad - B, d_in_p - d_in
    x_p = jnp.pad(x2d, ((0, pad_b), (0, pad_k))) if (pad_b or pad_k) else x2d

    use_softmax = (final_activation == "softmax")
    cost = pl.CostEstimate(
        flops=2 * b_pad * (d_in_p * h1 + h1 * h2 + h2 * d_out),
        transcendentals=b_pad * d_out if use_softmax else 0,
        bytes_accessed=(b_pad * d_in_p * 4
                        + (w1.size + w2.size + w3.size) * 2
                        + (b1.size + b2.size + b3.size) * 4
                        + b_pad * d_out * 4),
    )

    def run(single_buffer_consts: bool):
        cmode = ({"pipeline_mode": pl.Buffered(1)} if single_buffer_consts else {})
        if n_k == 1:
            kernel = functools.partial(_mlp_kernel, use_softmax=use_softmax)
            cidx = lambda i: (0, 0)
            in_specs = [
                pl.BlockSpec((tile_b, d_in_p), lambda i: (i, 0)),      # x stream
                pl.BlockSpec((d_in_p, h1), cidx, **cmode),             # resident
                pl.BlockSpec((1, h1), cidx, **cmode),
                pl.BlockSpec((h1, h2), cidx, **cmode),
                pl.BlockSpec((1, h2), cidx, **cmode),
                pl.BlockSpec((h2, d_out), cidx, **cmode),
                pl.BlockSpec((1, d_out), cidx, **cmode),
            ]
            out_spec = pl.BlockSpec((tile_b, d_out), lambda i: (i, 0))
            grid = (n_tiles,)
            scratch = []
            dims = ("parallel",)
        else:
            kernel = functools.partial(_mlp_kernel_ktiled, use_softmax=use_softmax)
            cidx = lambda i, k: (0, 0)
            in_specs = [
                pl.BlockSpec((tile_b, tile_k), lambda i, k: (i, k)),   # x stream
                pl.BlockSpec((tile_k, h1), lambda i, k: (k, 0)),       # w1 chunks
                pl.BlockSpec((1, h1), cidx, **cmode),
                pl.BlockSpec((h1, h2), cidx, **cmode),
                pl.BlockSpec((1, h2), cidx, **cmode),
                pl.BlockSpec((h2, d_out), cidx, **cmode),
                pl.BlockSpec((1, d_out), cidx, **cmode),
            ]
            out_spec = pl.BlockSpec((tile_b, d_out), lambda i, k: (i, 0))
            grid = (n_tiles, n_k)
            scratch = [pltpu.VMEM((tile_b, h1), jnp.float32)]
            dims = ("parallel", "arbitrary")

        return pl.pallas_call(
            kernel,
            out_shape=jax.ShapeDtypeStruct((b_pad, d_out), jnp.float32),
            grid=grid,
            in_specs=in_specs,
            out_specs=out_spec,
            scratch_shapes=scratch,
            compiler_params=pltpu.CompilerParams(
                dimension_semantics=dims,
                vmem_limit_bytes=vmem_limit),
            cost_estimate=cost,
        )(x_p, w1, b1, w2, b2, w3, b3)

    try:
        out = run(single_buffer_consts=True)
    except Exception:
        # Fallback if this jax version rejects single-buffered constant specs.
        out = run(single_buffer_consts=False)

    return out[:B] if b_pad != B else out


# --------------------------- reference & test --------------------------------

def init_mlp_params(key, input_dim, output_dim, hidden_dims=(128, 128)):
    """Deterministic synthetic parameter init (PyTorch-like uniform fan-in)."""
    dims = [input_dim] + list(hidden_dims) + [output_dim]
    params = {}
    keys = jax.random.split(key, 2 * (len(dims) - 1))
    for i in range(len(dims) - 1):
        fan_in, fan_out = dims[i], dims[i + 1]
        bound = 1.0 / jnp.sqrt(jnp.float32(fan_in))
        params[f"w{i + 1}"] = jax.random.uniform(
            keys[2 * i], (fan_in, fan_out), minval=-bound, maxval=bound,
            dtype=jnp.float32)
        params[f"b{i + 1}"] = jax.random.uniform(
            keys[2 * i + 1], (1, fan_out), minval=-bound, maxval=bound,
            dtype=jnp.float32)
    return params


def mlp_reference(x, params, final_activation=None):
    """Pure-JAX f32 reference for verification."""
    B = x.shape[0]
    h = x.reshape(B, -1).astype(jnp.float32)
    h = jnp.maximum(h @ params["w1"] + params["b1"], 0.0)
    h = jnp.maximum(h @ params["w2"] + params["b2"], 0.0)
    y = h @ params["w3"] + params["b3"]
    if final_activation == "softmax":
        y = jax.nn.softmax(y, axis=1)
    return y


if __name__ == "__main__":
    key = jax.random.PRNGKey(0)
    k_x, k_p, k_x2, k_p2 = jax.random.split(key, 4)

    # Small shapes consistent with the module: batch=2, a (4,16) per-sample
    # feature grid that flatten(start_dim=1) turns into D_in=64, D_out=8.
    B, F0, F1 = 2, 4, 16
    input_dim, output_dim = F0 * F1, 8

    x = jax.random.normal(k_x, (B, F0, F1), dtype=jnp.float32)
    raw_params = init_mlp_params(k_p, input_dim, output_dim)
    params = prepare_params(raw_params)          # one-time pad/cast (hoisted)

    # Plain (no final activation) variant.  bf16 matmul operands vs f32
    # reference -> loosened tolerance.
    out_plain = jax.block_until_ready(mlp_forward(x, params, final_activation=None))
    ref_plain = mlp_reference(x, raw_params, final_activation=None)
    assert out_plain.shape == (B, output_dim)
    assert jnp.allclose(out_plain, ref_plain, atol=3e-2, rtol=3e-2)

    # Softmax variant (final_activation='softmax', softmax over dim=1).
    out_sm = jax.block_until_ready(mlp_forward(x, params, final_activation="softmax"))
    ref_sm = mlp_reference(x, raw_params, final_activation="softmax")
    assert out_sm.shape == (B, output_dim)
    assert jnp.allclose(out_sm, ref_sm, atol=1e-2, rtol=1e-2)
    assert jnp.allclose(jnp.sum(out_sm, axis=1), jnp.ones((B,)), atol=5e-3)

    # Exercise the K-tiled (large-D_in) code path with a small forced chunk.
    B2, d_in2 = 4, 320
    x2 = jax.random.normal(k_x2, (B2, d_in2), dtype=jnp.float32)
    raw_params2 = init_mlp_params(k_p2, d_in2, output_dim)
    params2 = prepare_params(raw_params2, max_tile_k=128)      # -> n_k = 3
    out_kt = jax.block_until_ready(mlp_forward(x2, params2, final_activation=None))
    ref_kt = mlp_reference(x2, raw_params2, final_activation=None)
    assert out_kt.shape == (B2, output_dim)
    assert jnp.allclose(out_kt, ref_kt, atol=3e-2, rtol=3e-2)

    print("KERNEL_OK")
</pallas_src>

<mosaic_0001>
module attributes {stable_mosaic.version = 11 : i64} {
  func.func @_mlp_kernel(%arg0: i32, %arg1: memref<16x128xf32, #tpu.memory_space<vmem>>, %arg2: memref<128x128xbf16, #tpu.memory_space<vmem>>, %arg3: memref<1x128xf32, #tpu.memory_space<vmem>>, %arg4: memref<128x128xbf16, #tpu.memory_space<vmem>>, %arg5: memref<1x128xf32, #tpu.memory_space<vmem>>, %arg6: memref<128x8xbf16, #tpu.memory_space<vmem>>, %arg7: memref<1x8xf32, #tpu.memory_space<vmem>>, %arg8: memref<16x8xf32, #tpu.memory_space<vmem>>) attributes {dimension_semantics = [#tpu.dimension_semantics<parallel>], iteration_bounds = array<i64: 1>, scalar_prefetch = 0 : i64, scratch_operands = 0 : i64, tpu.core_type = #tpu.core_type<tc>, window_params = [{transform_indices = @transform_0, window_bounds = array<i64: 16, 128>}, {pipeline_mode = #tpu.pipeline_mode<synchronous>, transform_indices = @transform_1, window_bounds = array<i64: 128, 128>}, {pipeline_mode = #tpu.pipeline_mode<synchronous>, transform_indices = @transform_2, window_bounds = array<i64: 1, 128>}, {pipeline_mode = #tpu.pipeline_mode<synchronous>, transform_indices = @transform_3, window_bounds = array<i64: 128, 128>}, {pipeline_mode = #tpu.pipeline_mode<synchronous>, transform_indices = @transform_4, window_bounds = array<i64: 1, 128>}, {pipeline_mode = #tpu.pipeline_mode<synchronous>, transform_indices = @transform_5, window_bounds = array<i64: 128, 8>}, {pipeline_mode = #tpu.pipeline_mode<synchronous>, transform_indices = @transform_6, window_bounds = array<i64: 1, 8>}, {transform_indices = @transform_7, window_bounds = array<i64: 16, 8>}]} {
    %c0 = arith.constant 0 : index
    %c0_0 = arith.constant 0 : index
    %0 = vector.load %arg1[%c0, %c0_0] : memref<16x128xf32, #tpu.memory_space<vmem>>, vector<16x128xf32>
    %1 = arith.truncf %0 : vector<16x128xf32> to vector<16x128xbf16>
    %c0_1 = arith.constant 0 : index
    %c0_2 = arith.constant 0 : index
    %2 = vector.load %arg2[%c0_1, %c0_2] : memref<128x128xbf16, #tpu.memory_space<vmem>>, vector<128x128xbf16>
    %cst = arith.constant dense<0.000000e+00> : vector<16x128xf32>
    %3 = tpu.matmul %1, %2, %cst {dimension_numbers = #tpu.dot_dimension_numbers<[1], [0], [0], [1], [0, 0, 1, 1], [], []>} : vector<16x128xbf16>, vector<128x128xbf16>, vector<16x128xf32> -> vector<16x128xf32>
    %c0_3 = arith.constant 0 : index
    %c0_4 = arith.constant 0 : index
    %4 = vector.load %arg3[%c0_3, %c0_4] : memref<1x128xf32, #tpu.memory_space<vmem>>, vector<1x128xf32>
    %5 = vector.broadcast %4 : vector<1x128xf32> to vector<16x128xf32>
    %6 = arith.addf %3, %5 : vector<16x128xf32>
    %cst_5 = arith.constant 0.000000e+00 : f32
    %7 = vector.broadcast %cst_5 : f32 to vector<16x128xf32>
    %8 = arith.maximumf %6, %7 : vector<16x128xf32>
    %9 = arith.truncf %8 : vector<16x128xf32> to vector<16x128xbf16>
    %c0_6 = arith.constant 0 : index
    %c0_7 = arith.constant 0 : index
    %10 = vector.load %arg4[%c0_6, %c0_7] : memref<128x128xbf16, #tpu.memory_space<vmem>>, vector<128x128xbf16>
    %cst_8 = arith.constant dense<0.000000e+00> : vector<16x128xf32>
    %11 = tpu.matmul %9, %10, %cst_8 {dimension_numbers = #tpu.dot_dimension_numbers<[1], [0], [0], [1], [0, 0, 1, 1], [], []>} : vector<16x128xbf16>, vector<128x128xbf16>, vector<16x128xf32> -> vector<16x128xf32>
    %c0_9 = arith.constant 0 : index
    %c0_10 = arith.constant 0 : index
    %12 = vector.load %arg5[%c0_9, %c0_10] : memref<1x128xf32, #tpu.memory_space<vmem>>, vector<1x128xf32>
    %13 = vector.broadcast %12 : vector<1x128xf32> to vector<16x128xf32>
    %14 = arith.addf %11, %13 : vector<16x128xf32>
    %cst_11 = arith.constant 0.000000e+00 : f32
    %15 = vector.broadcast %cst_11 : f32 to vector<16x128xf32>
    %16 = arith.maximumf %14, %15 : vector<16x128xf32>
    %17 = arith.truncf %16 : vector<16x128xf32> to vector<16x128xbf16>
    %c0_12 = arith.constant 0 : index
    %c0_13 = arith.constant 0 : index
    %18 = vector.load %arg6[%c0_12, %c0_13] : memref<128x8xbf16, #tpu.memory_space<vmem>>, vector<128x8xbf16>
    %cst_14 = arith.constant dense<0.000000e+00> : vector<16x8xf32>
    %19 = tpu.matmul %17, %18, %cst_14 {dimension_numbers = #tpu.dot_dimension_numbers<[1], [0], [0], [1], [0, 0, 1, 1], [], []>} : vector<16x128xbf16>, vector<128x8xbf16>, vector<16x8xf32> -> vector<16x8xf32>
    %c0_15 = arith.constant 0 : index
    %c0_16 = arith.constant 0 : index
    %20 = vector.load %arg7[%c0_15, %c0_16] : memref<1x8xf32, #tpu.memory_space<vmem>>, vector<1x8xf32>
    %21 = vector.broadcast %20 : vector<1x8xf32> to vector<16x8xf32>
    %22 = arith.addf %19, %21 : vector<16x8xf32>
    %c0_17 = arith.constant 0 : index
    %c0_18 = arith.constant 0 : index
    %23 = vector.load %arg8[%c0_17, %c0_18] : memref<16x8xf32, #tpu.memory_space<vmem>>, vector<16x8xf32>
    tpu.vector_store %arg8[%c0_17, %c0_18], %22 {strides = array<i32>} : memref<16x8xf32, #tpu.memory_space<vmem>>, vector<16x8xf32>,
    return
  }
  func.func @transform_0(%arg0: i32) -> (i32, i32) {
    %c0_i32 = arith.constant 0 : i32
    %c0_i32_0 = arith.constant 0 : i32
    return %arg0, %c0_i32 : i32, i32
  }
  func.func @transform_1(%arg0: i32) -> (i32, i32) {
    %c0_i32 = arith.constant 0 : i32
    %c0_i32_0 = arith.constant 0 : i32
    %c0_i32_1 = arith.constant 0 : i32
    return %c0_i32, %c0_i32_0 : i32, i32
  }
  func.func @transform_2(%arg0: i32) -> (i32, i32) {
    %c0_i32 = arith.constant 0 : i32
    %c0_i32_0 = arith.constant 0 : i32
    %c0_i32_1 = arith.constant 0 : i32
    return %c0_i32, %c0_i32_0 : i32, i32
  }
  func.func @transform_3(%arg0: i32) -> (i32, i32) {
    %c0_i32 = arith.constant 0 : i32
    %c0_i32_0 = arith.constant 0 : i32
    %c0_i32_1 = arith.constant 0 : i32
    return %c0_i32, %c0_i32_0 : i32, i32
  }
  func.func @transform_4(%arg0: i32) -> (i32, i32) {
    %c0_i32 = arith.constant 0 : i32
    %c0_i32_0 = arith.constant 0 : i32
    %c0_i32_1 = arith.constant 0 : i32
    return %c0_i32, %c0_i32_0 : i32, i32
  }
  func.func @transform_5(%arg0: i32) -> (i32, i32) {
    %c0_i32 = arith.constant 0 : i32
    %c0_i32_0 = arith.constant 0 : i32
    %c0_i32_1 = arith.constant 0 : i32
    return %c0_i32, %c0_i32_0 : i32, i32
  }
  func.func @transform_6(%arg0: i32) -> (i32, i32) {
    %c0_i32 = arith.constant 0 : i32
    %c0_i32_0 = arith.constant 0 : i32
    %c0_i32_1 = arith.constant 0 : i32
    return %c0_i32, %c0_i32_0 : i32, i32
  }
  func.func @transform_7(%arg0: i32) -> (i32, i32) {
    %c0_i32 = arith.constant 0 : i32
    %c0_i32_0 = arith.constant 0 : i32
    return %arg0, %c0_i32 : i32, i32
  }
}

module attributes {stable_mosaic.version = 11 : i64} {
  func.func @_mlp_kernel(%arg0: i32, %arg1: memref<16x128xf32, #tpu.memory_space<vmem>>, %arg2: memref<128x128xbf16, #tpu.memory_space<vmem>>, %arg3: memref<1x128xf32, #tpu.memory_space<vmem>>, %arg4: memref<128x128xbf16, #tpu.memory_space<vmem>>, %arg5: memref<1x128xf32, #tpu.memory_space<vmem>>, %arg6: memref<128x8xbf16, #tpu.memory_space<vmem>>, %arg7: memref<1x8xf32, #tpu.memory_space<vmem>>, %arg8: memref<16x8xf32, #tpu.memory_space<vmem>>) attributes {dimension_semantics = [#tpu.dimension_semantics<parallel>], iteration_bounds = array<i64: 1>, scalar_prefetch = 0 : i64, scratch_operands = 0 : i64, tpu.core_type = #tpu.core_type<tc>, window_params = [{transform_indices = @transform_0, window_bounds = array<i64: 16, 128>}, {pipeline_mode = #tpu.pipeline_mode<synchronous>, transform_indices = @transform_1, window_bounds = array<i64: 128, 128>}, {pipeline_mode = #tpu.pipeline_mode<synchronous>, transform_indices = @transform_2, window_bounds = array<i64: 1, 128>}, {pipeline_mode = #tpu.pipeline_mode<synchronous>, transform_indices = @transform_3, window_bounds = array<i64: 128, 128>}, {pipeline_mode = #tpu.pipeline_mode<synchronous>, transform_indices = @transform_4, window_bounds = array<i64: 1, 128>}, {pipeline_mode = #tpu.pipeline_mode<synchronous>, transform_indices = @transform_5, window_bounds = array<i64: 128, 8>}, {pipeline_mode = #tpu.pipeline_mode<synchronous>, transform_indices = @transform_6, window_bounds = array<i64: 1, 8>}, {transform_indices = @transform_7, window_bounds = array<i64: 16, 8>}]} {
    %c0 = arith.constant 0 : index
    %c0_0 = arith.constant 0 : index
    %0 = vector.load %arg1[%c0, %c0_0] : memref<16x128xf32, #tpu.memory_space<vmem>>, vector<16x128xf32>
    %1 = arith.truncf %0 : vector<16x128xf32> to vector<16x128xbf16>
    %c0_1 = arith.constant 0 : index
    %c0_2 = arith.constant 0 : index
    %2 = vector.load %arg2[%c0_1, %c0_2] : memref<128x128xbf16, #tpu.memory_space<vmem>>, vector<128x128xbf16>
    %cst = arith.constant dense<0.000000e+00> : vector<16x128xf32>
    %3 = tpu.matmul %1, %2, %cst {dimension_numbers = #tpu.dot_dimension_numbers<[1], [0], [0], [1], [0, 0, 1, 1], [], []>} : vector<16x128xbf16>, vector<128x128xbf16>, vector<16x128xf32> -> vector<16x128xf32>
    %c0_3 = arith.constant 0 : index
    %c0_4 = arith.constant 0 : index
    %4 = vector.load %arg3[%c0_3, %c0_4] : memref<1x128xf32, #tpu.memory_space<vmem>>, vector<1x128xf32>
    %5 = vector.broadcast %4 : vector<1x128xf32> to vector<16x128xf32>
    %6 = arith.addf %3, %5 : vector<16x128xf32>
    %cst_5 = arith.constant 0.000000e+00 : f32
    %7 = vector.broadcast %cst_5 : f32 to vector<16x128xf32>
    %8 = arith.maximumf %6, %7 : vector<16x128xf32>
    %9 = arith.truncf %8 : vector<16x128xf32> to vector<16x128xbf16>
    %c0_6 = arith.constant 0 : index
    %c0_7 = arith.constant 0 : index
    %10 = vector.load %arg4[%c0_6, %c0_7] : memref<128x128xbf16, #tpu.memory_space<vmem>>, vector<128x128xbf16>
    %cst_8 = arith.constant dense<0.000000e+00> : vector<16x128xf32>
    %11 = tpu.matmul %9, %10, %cst_8 {dimension_numbers = #tpu.dot_dimension_numbers<[1], [0], [0], [1], [0, 0, 1, 1], [], []>} : vector<16x128xbf16>, vector<128x128xbf16>, vector<16x128xf32> -> vector<16x128xf32>
    %c0_9 = arith.constant 0 : index
    %c0_10 = arith.constant 0 : index
    %12 = vector.load %arg5[%c0_9, %c0_10] : memref<1x128xf32, #tpu.memory_space<vmem>>, vector<1x128xf32>
    %13 = vector.broadcast %12 : vector<1x128xf32> to vector<16x128xf32>
    %14 = arith.addf %11, %13 : vector<16x128xf32>
    %cst_11 = arith.constant 0.000000e+00 : f32
    %15 = vector.broadcast %cst_11 : f32 to vector<16x128xf32>
    %16 = arith.maximumf %14, %15 : vector<16x128xf32>
    %17 = arith.truncf %16 : vector<16x128xf32> to vector<16x128xbf16>
    %c0_12 = arith.constant 0 : index
    %c0_13 = arith.constant 0 : index
    %18 = vector.load %arg6[%c0_12, %c0_13] : memref<128x8xbf16, #tpu.memory_space<vmem>>, vector<128x8xbf16>
    %cst_14 = arith.constant dense<0.000000e+00> : vector<16x8xf32>
    %19 = tpu.matmul %17, %18, %cst_14 {dimension_numbers = #tpu.dot_dimension_numbers<[1], [0], [0], [1], [0, 0, 1, 1], [], []>} : vector<16x128xbf16>, vector<128x8xbf16>, vector<16x8xf32> -> vector<16x8xf32>
    %c0_15 = arith.constant 0 : index
    %c0_16 = arith.constant 0 : index
    %20 = vector.load %arg7[%c0_15, %c0_16] : memref<1x8xf32, #tpu.memory_space<vmem>>, vector<1x8xf32>
    %21 = vector.broadcast %20 : vector<1x8xf32> to vector<16x8xf32>
    %22 = arith.addf %19, %21 : vector<16x8xf32>
    %c0_17 = arith.constant 0 : index
    %c0_18 = arith.constant 0 : index
    %23 = vector.load %arg8[%c0_17, %c0_18] : memref<16x8xf32, #tpu.memory_space<vmem>>, vector<16x8xf32>
    tpu.vector_store %arg8[%c0_17, %c0_18], %22 {strides = array<i32>} : memref<16x8xf32, #tpu.memory_space<vmem>>, vector<16x8xf32>,
    return
  }
  func.func @transform_0(%arg0: i32) -> (i32, i32) {
    %c0_i32 = arith.constant 0 : i32
    %c0_i32_0 = arith.constant 0 : i32
    return %arg0, %c0_i32 : i32, i32
  }
  func.func @transform_1(%arg0: i32) -> (i32, i32) {
    %c0_i32 = arith.constant 0 : i32
    %c0_i32_0 = arith.constant 0 : i32
    %c0_i32_1 = arith.constant 0 : i32
    return %c0_i32, %c0_i32_0 : i32, i32
  }
  func.func @transform_2(%arg0: i32) -> (i32, i32) {
    %c0_i32 = arith.constant 0 : i32
    %c0_i32_0 = arith.constant 0 : i32
    %c0_i32_1 = arith.constant 0 : i32
    return %c0_i32, %c0_i32_0 : i32, i32
  }
  func.func @transform_3(%arg0: i32) -> (i32, i32) {
    %c0_i32 = arith.constant 0 : i32
    %c0_i32_0 = arith.constant 0 : i32
    %c0_i32_1 = arith.constant 0 : i32
    return %c0_i32, %c0_i32_0 : i32, i32
  }
  func.func @transform_4(%arg0: i32) -> (i32, i32) {
    %c0_i32 = arith.constant 0 : i32
    %c0_i32_0 = arith.constant 0 : i32
    %c0_i32_1 = arith.constant 0 : i32
    return %c0_i32, %c0_i32_0 : i32, i32
  }
  func.func @transform_5(%arg0: i32) -> (i32, i32) {
    %c0_i32 = arith.constant 0 : i32
    %c0_i32_0 = arith.constant 0 : i32
    %c0_i32_1 = arith.constant 0 : i32
    return %c0_i32, %c0_i32_0 : i32, i32
  }
  func.func @transform_6(%arg0: i32) -> (i32, i32) {
    %c0_i32 = arith.constant 0 : i32
    %c0_i32_0 = arith.constant 0 : i32
    %c0_i32_1 = arith.constant 0 : i32
    return %c0_i32, %c0_i32_0 : i32, i32
  }
  func.func @transform_7(%arg0: i32) -> (i32, i32) {
    %c0_i32 = arith.constant 0 : i32
    %c0_i32_0 = arith.constant 0 : i32
    return %arg0, %c0_i32 : i32, i32
  }
}

</mosaic_0001>

<llo_original>
// kernel: tpu_custom_call.1
$region0: #{tpu_custom_call.1}
  #allocation0 [shape = 'u32[]', space=smem, size = 0x4, offset = 0x4, fixed_abs, tag = 'smem constant byte address 0x4 - core index']
  #allocation1 [shape = 'u32[144,128]{1,0:T(1,128)}', space=vmem, size = 0x12000, scoped, tag = 'internal scratch']
  %s0 = inlined_call_operand.hbm [shape: f32[16,128], index: 0, kind: input, shape index: {}]
  %s1 = inlined_call_operand.vmem [shape: bf16[128,128], index: 1, kind: input, shape index: {}]
  %s2 = inlined_call_operand.vmem [shape: f32[1,128], index: 2, kind: input, shape index: {}]
  %s3 = inlined_call_operand.hbm [shape: bf16[128,128], index: 3, kind: input, shape index: {}]
  %s4 = inlined_call_operand.vmem [shape: f32[1,128], index: 4, kind: input, shape index: {}]
  %s5 = inlined_call_operand.vmem [shape: bf16[128,8], index: 5, kind: input, shape index: {}]
  %s6 = inlined_call_operand.vmem [shape: f32[1,8], index: 6, kind: input, shape index: {}]
  %s7 = inlined_call_operand.vmem [shape: f32[16,8], index: 7, kind: output, shape index: {}]
  %s8 = sld [smem:[#allocation0]]
  $region46: #{tpu_custom_call.1} parent=0
    _
  %s10 = ssub.s32 1, %s8
  %s11 = scalar_select 0, %s10, %s8
  $region1: #{tpu_custom_call.1} parent=0
    #allocation2 [shape = 'u8[8192]{0}', space=vmem, size = 0x2000, scoped, tag = 'input window, operand 0, single buffered']
    #allocation3 [shape = 's32[1]{0}', space=sflag, size = 0x4, scoped, tag = 'scoped memory for tpu_custom_call.1']
    #allocation4 [shape = 'u8[32768]{0}', space=vmem, size = 0x8000, scoped, tag = 'input window, operand 3, single buffered']
    #allocation5 [shape = 's32[1]{0}', space=sflag, size = 0x4, scoped, tag = 'scoped memory for tpu_custom_call.1']
    %12 = vsyncpa [#allocation3], 0
    %13 = vsyncpa [#allocation5], 0
    // Predicated region
    $region2: #{tpu_custom_call.1} parent=1 // pred_check
      _
    $region3: #{tpu_custom_call.1} parent=1 // pred_check_branch
      %15 = sbr.rel (0) target = $region5
    $region4: #{tpu_custom_call.1} parent=1 // pred_region
      %s17 = ssub.s32 256, 256
      %18 = vsyncadd [#allocation3], %s17
      %s19 = sshll.u32 [#allocation2], 4
      %s20 = int_to_ptr.vmem [resolvable:$true] %s19
      %25 = dma.hbm_to_vmem [thread:$0]  %s0, 256, %s20, [#allocation3], 128, 128, 8
    $region5: #{tpu_custom_call.1} parent=1 // pred_fallthru
      _
    // Predicated region
    $region6: #{tpu_custom_call.1} parent=1 // pred_check
      _
    $region7: #{tpu_custom_call.1} parent=1 // pred_check_branch
      %27 = sbr.rel (0) target = $region9
    $region8: #{tpu_custom_call.1} parent=1 // pred_region
      _
    $region9: #{tpu_custom_call.1} parent=1 // pred_fallthru
      _
    // Predicated region
    $region10: #{tpu_custom_call.1} parent=1 // pred_check
      _
    $region11: #{tpu_custom_call.1} parent=1 // pred_check_branch
      %29 = sbr.rel (0) target = $region13
    $region12: #{tpu_custom_call.1} parent=1 // pred_region
      _
    $region13: #{tpu_custom_call.1} parent=1 // pred_fallthru
      _
    // Predicated region
    $region14: #{tpu_custom_call.1} parent=1 // pred_check
      _
    $region15: #{tpu_custom_call.1} parent=1 // pred_check_branch
      %31 = sbr.rel (0) target = $region17
    $region16: #{tpu_custom_call.1} parent=1 // pred_region
      %s33 = ssub.s32 1024, 1024
      %34 = vsyncadd [#allocation5], %s33
      %s35 = sshll.u32 [#allocation4], 4
      %s36 = int_to_ptr.vmem [resolvable:$true] %s35
      %41 = dma.hbm_to_vmem [thread:$0]  %s3, 1024, %s36, [#allocation5], 64, 64, 4
    $region17: #{tpu_custom_call.1} parent=1 // pred_fallthru
      _
    // Predicated region
    $region18: #{tpu_custom_call.1} parent=1 // pred_check
      _
    $region19: #{tpu_custom_call.1} parent=1 // pred_check_branch
      %43 = sbr.rel (0) target = $region21
    $region20: #{tpu_custom_call.1} parent=1 // pred_region
      _
    $region21: #{tpu_custom_call.1} parent=1 // pred_fallthru
      _
    // Predicated region
    $region22: #{tpu_custom_call.1} parent=1 // pred_check
      _
    $region23: #{tpu_custom_call.1} parent=1 // pred_check_branch
      %45 = sbr.rel (0) target = $region25
    $region24: #{tpu_custom_call.1} parent=1 // pred_region
      _
    $region25: #{tpu_custom_call.1} parent=1 // pred_fallthru
      _
    // Predicated region
    $region26: #{tpu_custom_call.1} parent=1 // pred_check
      _
    $region27: #{tpu_custom_call.1} parent=1 // pred_check_branch
      %47 = sbr.rel (0) target = $region29
    $region28: #{tpu_custom_call.1} parent=1 // pred_region
      _
    $region29: #{tpu_custom_call.1} parent=1 // pred_fallthru
      _
    // Predicated region
    $region30: #{tpu_custom_call.1} parent=1 // pred_check
      _
    $region31: #{tpu_custom_call.1} parent=1 // pred_check_branch
      %49 = sbr.rel (0) target = $region33
    $region32: #{tpu_custom_call.1} parent=1 // pred_region
      %50 = dma.done [#allocation3], 256
    $region33: #{tpu_custom_call.1} parent=1 // pred_fallthru
      _
    // Predicated region
    $region34: #{tpu_custom_call.1} parent=1 // pred_check
      _
    $region35: #{tpu_custom_call.1} parent=1 // pred_check_branch
      %52 = sbr.rel (0) target = $region37
    $region36: #{tpu_custom_call.1} parent=1 // pred_region
      %53 = dma.done [#allocation5], 1024
    $region37: #{tpu_custom_call.1} parent=1 // pred_fallthru
      _
    %v55 = vld [vmem:[#allocation2] sm:$0xff]
    %v56 = vld [vmem:[#allocation2 + $0x8] sm:$0xff]
    %v57 = vpack.c.bf16 %v56, %v55
    %v58 = vld [vmem:[%s1] sm:$0xf]
    %v59 = vld [vmem:[%s1 + $0x4] sm:$0xf]
    %v60 = vld [vmem:[%s1 + $0x8] sm:$0xf]
    %v61 = vld [vmem:[%s1 + $0xc] sm:$0xf]
    %v62 = vld [vmem:[%s1 + $0x10] sm:$0xf]
    %v63 = vld [vmem:[%s1 + $0x14] sm:$0xf]
    %v64 = vld [vmem:[%s1 + $0x18] sm:$0xf]
    %v65 = vld [vmem:[%s1 + $0x1c] sm:$0xf]
    %v66 = vld [vmem:[%s1 + $0x20] sm:$0xf]
    %v67 = vld [vmem:[%s1 + $0x24] sm:$0xf]
    %v68 = vld [vmem:[%s1 + $0x28] sm:$0xf]
    %v69 = vld [vmem:[%s1 + $0x2c] sm:$0xf]
    %v70 = vld [vmem:[%s1 + $0x30] sm:$0xf]
    %v71 = vld [vmem:[%s1 + $0x34] sm:$0xf]
    %v72 = vld [vmem:[%s1 + $0x38] sm:$0xf]
    %v73 = vld [vmem:[%s1 + $0x3c] sm:$0xf]
    %v74 = vld [vmem:[%s2] sm:$0x1]
    %v76 = vlaneseq
    %v77 = vshrl.u32 %v76, 7
    %v78 = vsub.s32 0, %v77
    %v79 = vrot.slane %v74, %v78
    %v97 = vunpack.c.l.b16 %v58
    %v98 = vunpack.c.l.b16 %v59
    %v99 = vunpack.c.l.b16 %v60
    %v100 = vunpack.c.l.b16 %v61
    %v101 = vunpack.c.l.b16 %v62
    %v102 = vunpack.c.l.b16 %v63
    %v103 = vunpack.c.l.b16 %v64
    %v104 = vunpack.c.l.b16 %v65
    %v105 = vunpack.c.l.b16 %v66
    %v106 = vunpack.c.l.b16 %v67
    %v107 = vunpack.c.l.b16 %v68
    %v108 = vunpack.c.l.b16 %v69
    %v109 = vunpack.c.l.b16 %v70
    %v110 = vunpack.c.l.b16 %v71
    %v111 = vunpack.c.l.b16 %v72
    %v112 = vunpack.c.l.b16 %v73
    %v113 = vpack.c.b16 %v98, %v97
    %v114 = vpack.c.b16 %v100, %v99
    %v115 = vpack.c.b16 %v102, %v101
    %v116 = vpack.c.b16 %v104, %v103
    %v117 = vpack.c.b16 %v106, %v105
    %v118 = vpack.c.b16 %v108, %v107
    %v119 = vpack.c.b16 %v110, %v109
    %v120 = vpack.c.b16 %v112, %v111
    %129 = vmatprep.subr.bf16.mxu0 0
    %130 = vmatpush1.bf16.msra.mxu0 %v120
    %131 = vmatprep.subr.bf16.mxu0 0
    %132 = vmatpush1.bf16.msra.mxu0 %v119
    %133 = vmatprep.subr.bf16.mxu0 0
    %134 = vmatpush1.bf16.msra.mxu0 %v118
    %135 = vmatprep.subr.bf16.mxu0 0
    %136 = vmatpush1.bf16.msra.mxu0 %v117
    %137 = vmatprep.subr.bf16.mxu0 0
    %138 = vmatpush1.bf16.msra.mxu0 %v116
    %139 = vmatprep.subr.bf16.mxu0 0
    %140 = vmatpush1.bf16.msra.mxu0 %v115
    %141 = vmatprep.subr.bf16.mxu0 0
    %142 = vmatpush1.bf16.msra.mxu0 %v114
    %143 = vmatprep.subr.bf16.mxu0 0
    %144 = vmatpush1.bf16.msra.mxu0 %v113
    %145 = vmatprep.subr.bf16.mxu0 0
    %146 = vmatpush2.bf16.msra.mxu0 0
    %147 = vmatprep.subr.bf16.mxu0 0
    %148 = vmatpush2.bf16.msra.mxu0 0
    %149 = vmatprep.subr.bf16.mxu0 0
    %150 = vmatpush2.bf16.msra.mxu0 0
    %151 = vmatprep.subr.bf16.mxu0 0
    %152 = vmatpush2.bf16.msra.mxu0 0
    %153 = vmatprep.subr.bf16.mxu0 0
    %154 = vmatpush2.bf16.msra.mxu0 0
    %155 = vmatprep.subr.bf16.mxu0 0
    %156 = vmatpush2.bf16.msra.mxu0 0
    %157 = vmatprep.subr.bf16.mxu0 0
    %158 = vmatpush2.bf16.msra.mxu0 0
    %159 = vmatprep.subr.bf16.mxu0 0
    %160 = vmatpush2.bf16.msra.mxu0 0
    %161 = vmatprep.mubr.bf16.mxu0 0
    %162 = vmatmul.mubr.bf16.gmra.mxu0 %v57
    %v163 = vpop.f32.mrf.mxu0
    %v164 = vadd.f32 %v79, %v163
    %v165 = vpop.f32.mrf.mxu0
    %v166 = vpop.f32.mrf.mxu0
    %v167 = vadd.f32 %v79, %v166
    %v168 = vpop.f32.mrf.mxu0
    %169 = vdwg.mxu0
    %v170 = vmax.f32 %v164, 0.0
    %v171 = vmax.f32 %v167, 0.0
    %v172 = vpack.c.bf16 %v171, %v170
    %v173 = vld [vmem:[#allocation4] sm:$0xf]
    %v174 = vld [vmem:[#allocation4 + $0x4] sm:$0xf]
    %v175 = vld [vmem:[#allocation4 + $0x8] sm:$0xf]
    %v176 = vld [vmem:[#allocation4 + $0xc] sm:$0xf]
    %v177 = vld [vmem:[#allocation4 + $0x10] sm:$0xf]
    %v178 = vld [vmem:[#allocation4 + $0x14] sm:$0xf]
    %v179 = vld [vmem:[#allocation4 + $0x18] sm:$0xf]
    %v180 = vld [vmem:[#allocation4 + $0x1c] sm:$0xf]
    %v181 = vld [vmem:[#allocation4 + $0x20] sm:$0xf]
    %v182 = vld [vmem:[#allocation4 + $0x24] sm:$0xf]
    %v183 = vld [vmem:[#allocation4 + $0x28] sm:$0xf]
    %v184 = vld [vmem:[#allocation4 + $0x2c] sm:$0xf]
    %v185 = vld [vmem:[#allocation4 + $0x30] sm:$0xf]
    %v186 = vld [vmem:[#allocation4 + $0x34] sm:$0xf]
    %v187 = vld [vmem:[#allocation4 + $0x38] sm:$0xf]
    %v188 = vld [vmem:[#allocation4 + $0x3c] sm:$0xf]
    %v189 = vld [vmem:[%s4] sm:$0x1]
    %v191 = vlaneseq
    %v192 = vshrl.u32 %v191, 7
    %v193 = vsub.s32 0, %v192
    %v194 = vrot.slane %v189, %v193
    %v212 = vunpack.c.l.b16 %v173
    %v213 = vunpack.c.l.b16 %v174
    %v214 = vunpack.c.l.b16 %v175
    %v215 = vunpack.c.l.b16 %v176
    %v216 = vunpack.c.l.b16 %v177
    %v217 = vunpack.c.l.b16 %v178
    %v218 = vunpack.c.l.b16 %v179
    %v219 = vunpack.c.l.b16 %v180
    %v220 = vunpack.c.l.b16 %v181
    %v221 = vunpack.c.l.b16 %v182
    %v222 = vunpack.c.l.b16 %v183
    %v223 = vunpack.c.l.b16 %v184
    %v224 = vunpack.c.l.b16 %v185
    %v225 = vunpack.c.l.b16 %v186
    %v226 = vunpack.c.l.b16 %v187
    %v227 = vunpack.c.l.b16 %v188
    %v228 = vpack.c.b16 %v213, %v212
    %v229 = vpack.c.b16 %v215, %v214
    %v230 = vpack.c.b16 %v217, %v216
    %v231 = vpack.c.b16 %v219, %v218
    %v232 = vpack.c.b16 %v221, %v220
    %v233 = vpack.c.b16 %v223, %v222
    %v234 = vpack.c.b16 %v225, %v224
    %v235 = vpack.c.b16 %v227, %v226
    %244 = vmatprep.subr.bf16.mxu0 0
    %245 = vmatpush1.bf16.msra.mxu0 %v235
    %246 = vmatprep.subr.bf16.mxu0 0
    %247 = vmatpush1.bf16.msra.mxu0 %v234
    %248 = vmatprep.subr.bf16.mxu0 0
    %249 = vmatpush1.bf16.msra.mxu0 %v233
    %250 = vmatprep.subr.bf16.mxu0 0
    %251 = vmatpush1.bf16.msra.mxu0 %v232
    %252 = vmatprep.subr.bf16.mxu0 0
    %253 = vmatpush1.bf16.msra.mxu0 %v231
    %254 = vmatprep.subr.bf16.mxu0 0
    %255 = vmatpush1.bf16.msra.mxu0 %v230
    %256 = vmatprep.subr.bf16.mxu0 0
    %257 = vmatpush1.bf16.msra.mxu0 %v229
    %258 = vmatprep.subr.bf16.mxu0 0
    %259 = vmatpush1.bf16.msra.mxu0 %v228
    %260 = vmatprep.subr.bf16.mxu0 0
    %261 = vmatpush2.bf16.msra.mxu0 0
    %262 = vmatprep.subr.bf16.mxu0 0
    %263 = vmatpush2.bf16.msra.mxu0 0
    %264 = vmatprep.subr.bf16.mxu0 0
    %265 = vmatpush2.bf16.msra.mxu0 0
    %266 = vmatprep.subr.bf16.mxu0 0
    %267 = vmatpush2.bf16.msra.mxu0 0
    %268 = vmatprep.subr.bf16.mxu0 0
    %269 = vmatpush2.bf16.msra.mxu0 0
    %270 = vmatprep.subr.bf16.mxu0 0
    %271 = vmatpush2.bf16.msra.mxu0 0
    %272 = vmatprep.subr.bf16.mxu0 0
    %273 = vmatpush2.bf16.msra.mxu0 0
    %274 = vmatprep.subr.bf16.mxu0 0
    %275 = vmatpush2.bf16.msra.mxu0 0
    %276 = vmatprep.mubr.bf16.mxu0 0
    %277 = vmatmul.mubr.bf16.gmra.mxu0 %v172
    %v278 = vpop.f32.mrf.mxu0
    %v279 = vadd.f32 %v194, %v278
    %v280 = vpop.f32.mrf.mxu0
    %v281 = vpop.f32.mrf.mxu0
    %v282 = vadd.f32 %v194, %v281
    %v283 = vpop.f32.mrf.mxu0
    %284 = vdwg.mxu0
    %v285 = vmax.f32 %v279, 0.0
    %v286 = vmax.f32 %v282, 0.0
    %v287 = vpack.c.bf16 %v286, %v285
    %v288 = vld [vmem:[%s5] sm:$0xf]
    %v289 = vld [vmem:[%s5 + $0x4] sm:$0xf]
    %v290 = vld [vmem:[%s5 + $0x8] sm:$0xf]
    %v291 = vld [vmem:[%s5 + $0xc] sm:$0xf]
    %v292 = vld [vmem:[%s5 + $0x10] sm:$0xf]
    %v293 = vld [vmem:[%s5 + $0x14] sm:$0xf]
    %v294 = vld [vmem:[%s5 + $0x18] sm:$0xf]
    %v295 = vld [vmem:[%s5 + $0x1c] sm:$0xf]
    %v296 = vld [vmem:[%s5 + $0x20] sm:$0xf]
    %v297 = vld [vmem:[%s5 + $0x24] sm:$0xf]
    %v298 = vld [vmem:[%s5 + $0x28] sm:$0xf]
    %v299 = vld [vmem:[%s5 + $0x2c] sm:$0xf]
    %v300 = vld [vmem:[%s5 + $0x30] sm:$0xf]
    %v301 = vld [vmem:[%s5 + $0x34] sm:$0xf]
    %v302 = vld [vmem:[%s5 + $0x38] sm:$0xf]
    %v303 = vld [vmem:[%s5 + $0x3c] sm:$0xf]
    %v304 = vld [vmem:[%s6] sm:$0x1]
    %v306 = vlaneseq
    %v307 = vshrl.u32 %v306, 7
    %v308 = vsub.s32 0, %v307
    %v309 = vrot.slane %v304, %v308
    %v327 = vunpack.c.l.b16 %v288
    %v328 = vunpack.c.l.b16 %v289
    %v329 = vunpack.c.l.b16 %v290
    %v330 = vunpack.c.l.b16 %v291
    %v331 = vunpack.c.l.b16 %v292
    %v332 = vunpack.c.l.b16 %v293
    %v333 = vunpack.c.l.b16 %v294
    %v334 = vunpack.c.l.b16 %v295
    %v335 = vunpack.c.l.b16 %v296
    %v336 = vunpack.c.l.b16 %v297
    %v337 = vunpack.c.l.b16 %v298
    %v338 = vunpack.c.l.b16 %v299
    %v339 = vunpack.c.l.b16 %v300
    %v340 = vunpack.c.l.b16 %v301
    %v341 = vunpack.c.l.b16 %v302
    %v342 = vunpack.c.l.b16 %v303
    %v343 = vpack.c.b16 %v328, %v327
    %v344 = vpack.c.b16 %v330, %v329
    %v345 = vpack.c.b16 %v332, %v331
    %v346 = vpack.c.b16 %v334, %v333
    %v347 = vpack.c.b16 %v336, %v335
    %v348 = vpack.c.b16 %v338, %v337
    %v349 = vpack.c.b16 %v340, %v339
    %v350 = vpack.c.b16 %v342, %v341
    %359 = vmatprep.subr.bf16.mxu0 0
    %360 = vmatpush1.bf16.msra.mxu0 %v350
    %361 = vmatprep.subr.bf16.mxu0 0
    %362 = vmatpush1.bf16.msra.mxu0 %v349
    %363 = vmatprep.subr.bf16.mxu0 0
    %364 = vmatpush1.bf16.msra.mxu0 %v348
    %365 = vmatprep.subr.bf16.mxu0 0
    %366 = vmatpush1.bf16.msra.mxu0 %v347
    %367 = vmatprep.subr.bf16.mxu0 0
    %368 = vmatpush1.bf16.msra.mxu0 %v346
    %369 = vmatprep.subr.bf16.mxu0 0
    %370 = vmatpush1.bf16.msra.mxu0 %v345
    %371 = vmatprep.subr.bf16.mxu0 0
    %372 = vmatpush1.bf16.msra.mxu0 %v344
    %373 = vmatprep.subr.bf16.mxu0 0
    %374 = vmatpush1.bf16.msra.mxu0 %v343
    %375 = vmatprep.subr.bf16.mxu0 0
    %376 = vmatpush2.bf16.msra.mxu0 0
    %377 = vmatprep.subr.bf16.mxu0 0
    %378 = vmatpush2.bf16.msra.mxu0 0
    %379 = vmatprep.subr.bf16.mxu0 0
    %380 = vmatpush2.bf16.msra.mxu0 0
    %381 = vmatprep.subr.bf16.mxu0 0
    %382 = vmatpush2.bf16.msra.mxu0 0
    %383 = vmatprep.subr.bf16.mxu0 0
    %384 = vmatpush2.bf16.msra.mxu0 0
    %385 = vmatprep.subr.bf16.mxu0 0
    %386 = vmatpush2.bf16.msra.mxu0 0
    %387 = vmatprep.subr.bf16.mxu0 0
    %388 = vmatpush2.bf16.msra.mxu0 0
    %389 = vmatprep.subr.bf16.mxu0 0
    %390 = vmatpush2.bf16.msra.mxu0 0
    %391 = vmatprep.mubr.bf16.mxu0 0
    %392 = vmatmul.mubr.bf16.gmra.mxu0 %v287
    %v393 = vpop.f32.mrf.mxu0
    %v394 = vadd.f32 %v309, %v393
    %v395 = vpop.f32.mrf.mxu0
    %v396 = vpop.f32.mrf.mxu0
    %v397 = vadd.f32 %v309, %v396
    %v398 = vpop.f32.mrf.mxu0
    %399 = vdwg.mxu0
    %vm400 = vcmask 64512
    %401 = vst.msk [vmem:[%s7] sm:$0xff] %vm400, %v394
    %402 = vst.msk [vmem:[%s7 + $0x8] sm:$0xff] %vm400, %v397
    // Predicated region
    $region38: #{tpu_custom_call.1} parent=1 // pred_check
      _
    $region39: #{tpu_custom_call.1} parent=1 // pred_check_branch
      %404 = sbr.rel (0) target = $region41
    $region40: #{tpu_custom_call.1} parent=1 // pred_region
      _
    $region41: #{tpu_custom_call.1} parent=1 // pred_fallthru
      _
    // Predicated region
    $region42: #{tpu_custom_call.1} parent=1 // pred_check
      _
    $region43: #{tpu_custom_call.1} parent=1 // pred_check_branch
      %406 = sbr.rel (0) target = $region45
    $region44: #{tpu_custom_call.1} parent=1 // pred_region
      _
    $region45: #{tpu_custom_call.1} parent=1 // pred_fallthru
      _
    %407 = vsyncpa [#allocation3], 1
    %408 = vsyncpa [#allocation5], 1

// kernel: tpu_custom_call.1
$region0: #{tpu_custom_call.1}
  #allocation0 [shape = 'u32[]', space=smem, size = 0x4, offset = 0x4, fixed_abs, tag = 'smem constant byte address 0x4 - core index']
  #allocation1 [shape = 'u32[144,128]{1,0:T(1,128)}', space=vmem, size = 0x12000, scoped, tag = 'internal scratch']
  %s0 = inlined_call_operand.hbm [shape: f32[16,128], index: 0, kind: input, shape index: {}]
  %s1 = inlined_call_operand.vmem [shape: bf16[128,128], index: 1, kind: input, shape index: {}]
  %s2 = inlined_call_operand.vmem [shape: f32[1,128], index: 2, kind: input, shape index: {}]
  %s3 = inlined_call_operand.hbm [shape: bf16[128,128], index: 3, kind: input, shape index: {}]
  %s4 = inlined_call_operand.vmem [shape: f32[1,128], index: 4, kind: input, shape index: {}]
  %s5 = inlined_call_operand.vmem [shape: bf16[128,8], index: 5, kind: input, shape index: {}]
  %s6 = inlined_call_operand.vmem [shape: f32[1,8], index: 6, kind: input, shape index: {}]
  %s7 = inlined_call_operand.vmem [shape: f32[16,8], index: 7, kind: output, shape index: {}]
  %s8 = sld [smem:[#allocation0]]
  $region46: #{tpu_custom_call.1} parent=0
    _
  %s10 = ssub.s32 1, %s8
  %s11 = scalar_select 0, %s10, %s8
  $region1: #{tpu_custom_call.1} parent=0
    #allocation2 [shape = 'u8[8192]{0}', space=vmem, size = 0x2000, scoped, tag = 'input window, operand 0, single buffered']
    #allocation3 [shape = 's32[1]{0}', space=sflag, size = 0x4, scoped, tag = 'scoped memory for tpu_custom_call.1']
    #allocation4 [shape = 'u8[32768]{0}', space=vmem, size = 0x8000, scoped, tag = 'input window, operand 3, single buffered']
    #allocation5 [shape = 's32[1]{0}', space=sflag, size = 0x4, scoped, tag = 'scoped memory for tpu_custom_call.1']
    %12 = vsyncpa [#allocation3], 0
    %13 = vsyncpa [#allocation5], 0
    // Predicated region
    $region2: #{tpu_custom_call.1} parent=1 // pred_check
      _
    $region3: #{tpu_custom_call.1} parent=1 // pred_check_branch
      %15 = sbr.rel (0) target = $region5
    $region4: #{tpu_custom_call.1} parent=1 // pred_region
      %s17 = ssub.s32 256, 256
      %18 = vsyncadd [#allocation3], %s17
      %s19 = sshll.u32 [#allocation2], 4
      %s20 = int_to_ptr.vmem [resolvable:$true] %s19
      %25 = dma.hbm_to_vmem [thread:$0]  %s0, 256, %s20, [#allocation3], 128, 128, 8
    $region5: #{tpu_custom_call.1} parent=1 // pred_fallthru
      _
    // Predicated region
    $region6: #{tpu_custom_call.1} parent=1 // pred_check
      _
    $region7: #{tpu_custom_call.1} parent=1 // pred_check_branch
      %27 = sbr.rel (0) target = $region9
    $region8: #{tpu_custom_call.1} parent=1 // pred_region
      _
    $region9: #{tpu_custom_call.1} parent=1 // pred_fallthru
      _
    // Predicated region
    $region10: #{tpu_custom_call.1} parent=1 // pred_check
      _
    $region11: #{tpu_custom_call.1} parent=1 // pred_check_branch
      %29 = sbr.rel (0) target = $region13
    $region12: #{tpu_custom_call.1} parent=1 // pred_region
      _
    $region13: #{tpu_custom_call.1} parent=1 // pred_fallthru
      _
    // Predicated region
    $region14: #{tpu_custom_call.1} parent=1 // pred_check
      _
    $region15: #{tpu_custom_call.1} parent=1 // pred_check_branch
      %31 = sbr.rel (0) target = $region17
    $region16: #{tpu_custom_call.1} parent=1 // pred_region
      %s33 = ssub.s32 1024, 1024
      %34 = vsyncadd [#allocation5], %s33
      %s35 = sshll.u32 [#allocation4], 4
      %s36 = int_to_ptr.vmem [resolvable:$true] %s35
      %41 = dma.hbm_to_vmem [thread:$0]  %s3, 1024, %s36, [#allocation5], 64, 64, 4
    $region17: #{tpu_custom_call.1} parent=1 // pred_fallthru
      _
    // Predicated region
    $region18: #{tpu_custom_call.1} parent=1 // pred_check
      _
    $region19: #{tpu_custom_call.1} parent=1 // pred_check_branch
      %43 = sbr.rel (0) target = $region21
    $region20: #{tpu_custom_call.1} parent=1 // pred_region
      _
    $region21: #{tpu_custom_call.1} parent=1 // pred_fallthru
      _
    // Predicated region
    $region22: #{tpu_custom_call.1} parent=1 // pred_check
      _
    $region23: #{tpu_custom_call.1} parent=1 // pred_check_branch
      %45 = sbr.rel (0) target = $region25
    $region24: #{tpu_custom_call.1} parent=1 // pred_region
      _
    $region25: #{tpu_custom_call.1} parent=1 // pred_fallthru
      _
    // Predicated region
    $region26: #{tpu_custom_call.1} parent=1 // pred_check
      _
    $region27: #{tpu_custom_call.1} parent=1 // pred_check_branch
      %47 = sbr.rel (0) target = $region29
    $region28: #{tpu_custom_call.1} parent=1 // pred_region
      _
    $region29: #{tpu_custom_call.1} parent=1 // pred_fallthru
      _
    // Predicated region
    $region30: #{tpu_custom_call.1} parent=1 // pred_check
      _
    $region31: #{tpu_custom_call.1} parent=1 // pred_check_branch
      %49 = sbr.rel (0) target = $region33
    $region32: #{tpu_custom_call.1} parent=1 // pred_region
      %50 = dma.done [#allocation3], 256
    $region33: #{tpu_custom_call.1} parent=1 // pred_fallthru
      _
    // Predicated region
    $region34: #{tpu_custom_call.1} parent=1 // pred_check
      _
    $region35: #{tpu_custom_call.1} parent=1 // pred_check_branch
      %52 = sbr.rel (0) target = $region37
    $region36: #{tpu_custom_call.1} parent=1 // pred_region
      %53 = dma.done [#allocation5], 1024
    $region37: #{tpu_custom_call.1} parent=1 // pred_fallthru
      _
    %v55 = vld [vmem:[#allocation2] sm:$0xff]
    %v56 = vld [vmem:[#allocation2 + $0x8] sm:$0xff]
    %v57 = vpack.c.bf16 %v56, %v55
    %v58 = vld [vmem:[%s1] sm:$0xf]
    %v59 = vld [vmem:[%s1 + $0x4] sm:$0xf]
    %v60 = vld [vmem:[%s1 + $0x8] sm:$0xf]
    %v61 = vld [vmem:[%s1 + $0xc] sm:$0xf]
    %v62 = vld [vmem:[%s1 + $0x10] sm:$0xf]
    %v63 = vld [vmem:[%s1 + $0x14] sm:$0xf]
    %v64 = vld [vmem:[%s1 + $0x18] sm:$0xf]
    %v65 = vld [vmem:[%s1 + $0x1c] sm:$0xf]
    %v66 = vld [vmem:[%s1 + $0x20] sm:$0xf]
    %v67 = vld [vmem:[%s1 + $0x24] sm:$0xf]
    %v68 = vld [vmem:[%s1 + $0x28] sm:$0xf]
    %v69 = vld [vmem:[%s1 + $0x2c] sm:$0xf]
    %v70 = vld [vmem:[%s1 + $0x30] sm:$0xf]
    %v71 = vld [vmem:[%s1 + $0x34] sm:$0xf]
    %v72 = vld [vmem:[%s1 + $0x38] sm:$0xf]
    %v73 = vld [vmem:[%s1 + $0x3c] sm:$0xf]
    %v74 = vld [vmem:[%s2] sm:$0x1]
    %v76 = vlaneseq
    %v77 = vshrl.u32 %v76, 7
    %v78 = vsub.s32 0, %v77
    %v79 = vrot.slane %v74, %v78
    %v97 = vunpack.c.l.b16 %v58
    %v98 = vunpack.c.l.b16 %v59
    %v99 = vunpack.c.l.b16 %v60
    %v100 = vunpack.c.l.b16 %v61
    %v101 = vunpack.c.l.b16 %v62
    %v102 = vunpack.c.l.b16 %v63
    %v103 = vunpack.c.l.b16 %v64
    %v104 = vunpack.c.l.b16 %v65
    %v105 = vunpack.c.l.b16 %v66
    %v106 = vunpack.c.l.b16 %v67
    %v107 = vunpack.c.l.b16 %v68
    %v108 = vunpack.c.l.b16 %v69
    %v109 = vunpack.c.l.b16 %v70
    %v110 = vunpack.c.l.b16 %v71
    %v111 = vunpack.c.l.b16 %v72
    %v112 = vunpack.c.l.b16 %v73
    %v113 = vpack.c.b16 %v98, %v97
    %v114 = vpack.c.b16 %v100, %v99
    %v115 = vpack.c.b16 %v102, %v101
    %v116 = vpack.c.b16 %v104, %v103
    %v117 = vpack.c.b16 %v106, %v105
    %v118 = vpack.c.b16 %v108, %v107
    %v119 = vpack.c.b16 %v110, %v109
    %v120 = vpack.c.b16 %v112, %v111
    %129 = vmatprep.subr.bf16.mxu0 0
    %130 = vmatpush1.bf16.msra.mxu0 %v120
    %131 = vmatprep.subr.bf16.mxu0 0
    %132 = vmatpush1.bf16.msra.mxu0 %v119
    %133 = vmatprep.subr.bf16.mxu0 0
    %134 = vmatpush1.bf16.msra.mxu0 %v118
    %135 = vmatprep.subr.bf16.mxu0 0
    %136 = vmatpush1.bf16.msra.mxu0 %v117
    %137 = vmatprep.subr.bf16.mxu0 0
    %138 = vmatpush1.bf16.msra.mxu0 %v116
    %139 = vmatprep.subr.bf16.mxu0 0
    %140 = vmatpush1.bf16.msra.mxu0 %v115
    %141 = vmatprep.subr.bf16.mxu0 0
    %142 = vmatpush1.bf16.msra.mxu0 %v114
    %143 = vmatprep.subr.bf16.mxu0 0
    %144 = vmatpush1.bf16.msra.mxu0 %v113
    %145 = vmatprep.subr.bf16.mxu0 0
    %146 = vmatpush2.bf16.msra.mxu0 0
    %147 = vmatprep.subr.bf16.mxu0 0
    %148 = vmatpush2.bf16.msra.mxu0 0
    %149 = vmatprep.subr.bf16.mxu0 0
    %150 = vmatpush2.bf16.msra.mxu0 0
    %151 = vmatprep.subr.bf16.mxu0 0
    %152 = vmatpush2.bf16.msra.mxu0 0
    %153 = vmatprep.subr.bf16.mxu0 0
    %154 = vmatpush2.bf16.msra.mxu0 0
    %155 = vmatprep.subr.bf16.mxu0 0
    %156 = vmatpush2.bf16.msra.mxu0 0
    %157 = vmatprep.subr.bf16.mxu0 0
    %158 = vmatpush2.bf16.msra.mxu0 0
    %159 = vmatprep.subr.bf16.mxu0 0
    %160 = vmatpush2.bf16.msra.mxu0 0
    %161 = vmatprep.mubr.bf16.mxu0 0
    %162 = vmatmul.mubr.bf16.gmra.mxu0 %v57
    %v163 = vpop.f32.mrf.mxu0
    %v164 = vadd.f32 %v79, %v163
    %v165 = vpop.f32.mrf.mxu0
    %v166 = vpop.f32.mrf.mxu0
    %v167 = vadd.f32 %v79, %v166
    %v168 = vpop.f32.mrf.mxu0
    %169 = vdwg.mxu0
    %v170 = vmax.f32 %v164, 0.0
    %v171 = vmax.f32 %v167, 0.0
    %v172 = vpack.c.bf16 %v171, %v170
    %v173 = vld [vmem:[#allocation4] sm:$0xf]
    %v174 = vld [vmem:[#allocation4 + $0x4] sm:$0xf]
    %v175 = vld [vmem:[#allocation4 + $0x8] sm:$0xf]
    %v176 = vld [vmem:[#allocation4 + $0xc] sm:$0xf]
    %v177 = vld [vmem:[#allocation4 + $0x10] sm:$0xf]
    %v178 = vld [vmem:[#allocation4 + $0x14] sm:$0xf]
    %v179 = vld [vmem:[#allocation4 + $0x18] sm:$0xf]
    %v180 = vld [vmem:[#allocation4 + $0x1c] sm:$0xf]
    %v181 = vld [vmem:[#allocation4 + $0x20] sm:$0xf]
    %v182 = vld [vmem:[#allocation4 + $0x24] sm:$0xf]
    %v183 = vld [vmem:[#allocation4 + $0x28] sm:$0xf]
    %v184 = vld [vmem:[#allocation4 + $0x2c] sm:$0xf]
    %v185 = vld [vmem:[#allocation4 + $0x30] sm:$0xf]
    %v186 = vld [vmem:[#allocation4 + $0x34] sm:$0xf]
    %v187 = vld [vmem:[#allocation4 + $0x38] sm:$0xf]
    %v188 = vld [vmem:[#allocation4 + $0x3c] sm:$0xf]
    %v189 = vld [vmem:[%s4] sm:$0x1]
    %v191 = vlaneseq
    %v192 = vshrl.u32 %v191, 7
    %v193 = vsub.s32 0, %v192
    %v194 = vrot.slane %v189, %v193
    %v212 = vunpack.c.l.b16 %v173
    %v213 = vunpack.c.l.b16 %v174
    %v214 = vunpack.c.l.b16 %v175
    %v215 = vunpack.c.l.b16 %v176
    %v216 = vunpack.c.l.b16 %v177
    %v217 = vunpack.c.l.b16 %v178
    %v218 = vunpack.c.l.b16 %v179
    %v219 = vunpack.c.l.b16 %v180
    %v220 = vunpack.c.l.b16 %v181
    %v221 = vunpack.c.l.b16 %v182
    %v222 = vunpack.c.l.b16 %v183
    %v223 = vunpack.c.l.b16 %v184
    %v224 = vunpack.c.l.b16 %v185
    %v225 = vunpack.c.l.b16 %v186
    %v226 = vunpack.c.l.b16 %v187
    %v227 = vunpack.c.l.b16 %v188
    %v228 = vpack.c.b16 %v213, %v212
    %v229 = vpack.c.b16 %v215, %v214
    %v230 = vpack.c.b16 %v217, %v216
    %v231 = vpack.c.b16 %v219, %v218
    %v232 = vpack.c.b16 %v221, %v220
    %v233 = vpack.c.b16 %v223, %v222
    %v234 = vpack.c.b16 %v225, %v224
    %v235 = vpack.c.b16 %v227, %v226
    %244 = vmatprep.subr.bf16.mxu0 0
    %245 = vmatpush1.bf16.msra.mxu0 %v235
    %246 = vmatprep.subr.bf16.mxu0 0
    %247 = vmatpush1.bf16.msra.mxu0 %v234
    %248 = vmatprep.subr.bf16.mxu0 0
    %249 = vmatpush1.bf16.msra.mxu0 %v233
    %250 = vmatprep.subr.bf16.mxu0 0
    %251 = vmatpush1.bf16.msra.mxu0 %v232
    %252 = vmatprep.subr.bf16.mxu0 0
    %253 = vmatpush1.bf16.msra.mxu0 %v231
    %254 = vmatprep.subr.bf16.mxu0 0
    %255 = vmatpush1.bf16.msra.mxu0 %v230
    %256 = vmatprep.subr.bf16.mxu0 0
    %257 = vmatpush1.bf16.msra.mxu0 %v229
    %258 = vmatprep.subr.bf16.mxu0 0
    %259 = vmatpush1.bf16.msra.mxu0 %v228
    %260 = vmatprep.subr.bf16.mxu0 0
    %261 = vmatpush2.bf16.msra.mxu0 0
    %262 = vmatprep.subr.bf16.mxu0 0
    %263 = vmatpush2.bf16.msra.mxu0 0
    %264 = vmatprep.subr.bf16.mxu0 0
    %265 = vmatpush2.bf16.msra.mxu0 0
    %266 = vmatprep.subr.bf16.mxu0 0
    %267 = vmatpush2.bf16.msra.mxu0 0
    %268 = vmatprep.subr.bf16.mxu0 0
    %269 = vmatpush2.bf16.msra.mxu0 0
    %270 = vmatprep.subr.bf16.mxu0 0
    %271 = vmatpush2.bf16.msra.mxu0 0
    %272 = vmatprep.subr.bf16.mxu0 0
    %273 = vmatpush2.bf16.msra.mxu0 0
    %274 = vmatprep.subr.bf16.mxu0 0
    %275 = vmatpush2.bf16.msra.mxu0 0
    %276 = vmatprep.mubr.bf16.mxu0 0
    %277 = vmatmul.mubr.bf16.gmra.mxu0 %v172
    %v278 = vpop.f32.mrf.mxu0
    %v279 = vadd.f32 %v194, %v278
    %v280 = vpop.f32.mrf.mxu0
    %v281 = vpop.f32.mrf.mxu0
    %v282 = vadd.f32 %v194, %v281
    %v283 = vpop.f32.mrf.mxu0
    %284 = vdwg.mxu0
    %v285 = vmax.f32 %v279, 0.0
    %v286 = vmax.f32 %v282, 0.0
    %v287 = vpack.c.bf16 %v286, %v285
    %v288 = vld [vmem:[%s5] sm:$0xf]
    %v289 = vld [vmem:[%s5 + $0x4] sm:$0xf]
    %v290 = vld [vmem:[%s5 + $0x8] sm:$0xf]
    %v291 = vld [vmem:[%s5 + $0xc] sm:$0xf]
    %v292 = vld [vmem:[%s5 + $0x10] sm:$0xf]
    %v293 = vld [vmem:[%s5 + $0x14] sm:$0xf]
    %v294 = vld [vmem:[%s5 + $0x18] sm:$0xf]
    %v295 = vld [vmem:[%s5 + $0x1c] sm:$0xf]
    %v296 = vld [vmem:[%s5 + $0x20] sm:$0xf]
    %v297 = vld [vmem:[%s5 + $0x24] sm:$0xf]
    %v298 = vld [vmem:[%s5 + $0x28] sm:$0xf]
    %v299 = vld [vmem:[%s5 + $0x2c] sm:$0xf]
    %v300 = vld [vmem:[%s5 + $0x30] sm:$0xf]
    %v301 = vld [vmem:[%s5 + $0x34] sm:$0xf]
    %v302 = vld [vmem:[%s5 + $0x38] sm:$0xf]
    %v303 = vld [vmem:[%s5 + $0x3c] sm:$0xf]
    %v304 = vld [vmem:[%s6] sm:$0x1]
    %v306 = vlaneseq
    %v307 = vshrl.u32 %v306, 7
    %v308 = vsub.s32 0, %v307
    %v309 = vrot.slane %v304, %v308
    %v327 = vunpack.c.l.b16 %v288
    %v328 = vunpack.c.l.b16 %v289
    %v329 = vunpack.c.l.b16 %v290
    %v330 = vunpack.c.l.b16 %v291
    %v331 = vunpack.c.l.b16 %v292
    %v332 = vunpack.c.l.b16 %v293
    %v333 = vunpack.c.l.b16 %v294
    %v334 = vunpack.c.l.b16 %v295
    %v335 = vunpack.c.l.b16 %v296
    %v336 = vunpack.c.l.b16 %v297
    %v337 = vunpack.c.l.b16 %v298
    %v338 = vunpack.c.l.b16 %v299
    %v339 = vunpack.c.l.b16 %v300
    %v340 = vunpack.c.l.b16 %v301
    %v341 = vunpack.c.l.b16 %v302
    %v342 = vunpack.c.l.b16 %v303
    %v343 = vpack.c.b16 %v328, %v327
    %v344 = vpack.c.b16 %v330, %v329
    %v345 = vpack.c.b16 %v332, %v331
    %v346 = vpack.c.b16 %v334, %v333
    %v347 = vpack.c.b16 %v336, %v335
    %v348 = vpack.c.b16 %v338, %v337
    %v349 = vpack.c.b16 %v340, %v339
    %v350 = vpack.c.b16 %v342, %v341
    %359 = vmatprep.subr.bf16.mxu0 0
    %360 = vmatpush1.bf16.msra.mxu0 %v350
    %361 = vmatprep.subr.bf16.mxu0 0
    %362 = vmatpush1.bf16.msra.mxu0 %v349
    %363 = vmatprep.subr.bf16.mxu0 0
    %364 = vmatpush1.bf16.msra.mxu0 %v348
    %365 = vmatprep.subr.bf16.mxu0 0
    %366 = vmatpush1.bf16.msra.mxu0 %v347
    %367 = vmatprep.subr.bf16.mxu0 0
    %368 = vmatpush1.bf16.msra.mxu0 %v346
    %369 = vmatprep.subr.bf16.mxu0 0
    %370 = vmatpush1.bf16.msra.mxu0 %v345
    %371 = vmatprep.subr.bf16.mxu0 0
    %372 = vmatpush1.bf16.msra.mxu0 %v344
    %373 = vmatprep.subr.bf16.mxu0 0
    %374 = vmatpush1.bf16.msra.mxu0 %v343
    %375 = vmatprep.subr.bf16.mxu0 0
    %376 = vmatpush2.bf16.msra.mxu0 0
    %377 = vmatprep.subr.bf16.mxu0 0
    %378 = vmatpush2.bf16.msra.mxu0 0
    %379 = vmatprep.subr.bf16.mxu0 0
    %380 = vmatpush2.bf16.msra.mxu0 0
    %381 = vmatprep.subr.bf16.mxu0 0
    %382 = vmatpush2.bf16.msra.mxu0 0
    %383 = vmatprep.subr.bf16.mxu0 0
    %384 = vmatpush2.bf16.msra.mxu0 0
    %385 = vmatprep.subr.bf16.mxu0 0
    %386 = vmatpush2.bf16.msra.mxu0 0
    %387 = vmatprep.subr.bf16.mxu0 0
    %388 = vmatpush2.bf16.msra.mxu0 0
    %389 = vmatprep.subr.bf16.mxu0 0
    %390 = vmatpush2.bf16.msra.mxu0 0
    %391 = vmatprep.mubr.bf16.mxu0 0
    %392 = vmatmul.mubr.bf16.gmra.mxu0 %v287
    %v393 = vpop.f32.mrf.mxu0
    %v394 = vadd.f32 %v309, %v393
    %v395 = vpop.f32.mrf.mxu0
    %v396 = vpop.f32.mrf.mxu0
    %v397 = vadd.f32 %v309, %v396
    %v398 = vpop.f32.mrf.mxu0
    %399 = vdwg.mxu0
    %vm400 = vcmask 64512
    %401 = vst.msk [vmem:[%s7] sm:$0xff] %vm400, %v394
    %402 = vst.msk [vmem:[%s7 + $0x8] sm:$0xff] %vm400, %v397
    // Predicated region
    $region38: #{tpu_custom_call.1} parent=1 // pred_check
      _
    $region39: #{tpu_custom_call.1} parent=1 // pred_check_branch
      %404 = sbr.rel (0) target = $region41
    $region40: #{tpu_custom_call.1} parent=1 // pred_region
      _
    $region41: #{tpu_custom_call.1} parent=1 // pred_fallthru
      _
    // Predicated region
    $region42: #{tpu_custom_call.1} parent=1 // pred_check
      _
    $region43: #{tpu_custom_call.1} parent=1 // pred_check_branch
      %406 = sbr.rel (0) target = $region45
    $region44: #{tpu_custom_call.1} parent=1 // pred_region
      _
    $region45: #{tpu_custom_call.1} parent=1 // pred_fallthru
      _
    %407 = vsyncpa [#allocation3], 1
    %408 = vsyncpa [#allocation5], 1

</llo_original>
